<compile_context>
chip_gen: v6e
topology: v6e:2x2x1
jax: 0.10.0
libtpu: 0.0.40
codegen_flags: <defaults>
</compile_context>

<pallas_src>
import math
from functools import partial

import jax
import jax.numpy as jnp
from jax.experimental import pallas as pl
from jax.experimental.pallas import tpu as pltpu


TOK_TILE = 256  # gathered rows per grid step (clamped in the wrapper)


# ----------------------------------------------------------------------------
# Kernel
# ----------------------------------------------------------------------------
def _token_embedding_kernel(ids_ref, table_hbm, o_ref, scratch, sem,
                            *, tok_tile: int, scale: float):
    # ids_ref   : SMEM scalar-prefetch ref with all (padded) token ids
    # table_hbm : (V, E_pad) embedding table, left in HBM (memory_space=ANY)
    # o_ref     : (tok_tile, E_pad) output tile in VMEM
    # scratch   : (tok_tile, E_pad) VMEM gather buffer
    # sem       : (1,) DMA semaphore shared by all row copies of this tile
    base = pl.program_id(0) * tok_tile

    # Blast-issue all row gathers for this tile: many small DMAs in flight at
    # once so the fixed per-descriptor latency overlaps instead of serializing.
    @pl.loop(0, tok_tile)
    def _issue(t):
        row = ids_ref[base + t]
        pltpu.make_async_copy(
            table_hbm.at[pl.ds(row, 1)],   # (1, E_pad) table row in HBM
            scratch.at[pl.ds(t, 1)],       # (1, E_pad) slot in the gather buffer
            sem.at[0],
        ).start()

    # Drain: all copies are identical in size and share one semaphore, so one
    # wait per issued copy guarantees every row has landed before we read.
    @pl.loop(0, tok_tile)
    def _wait(t):
        pltpu.make_async_copy(
            table_hbm.at[pl.ds(0, 1)],     # placeholder src; wait uses sem + size only
            scratch.at[pl.ds(t, 1)],
            sem.at[0],
        ).wait()

    # Single dense scale + store of the whole (tok_tile, E_pad) tile.
    # Scale in f32 (exact sqrt(E)), then cast to the table/output dtype.
    vals = scratch[...].astype(jnp.float32) * jnp.float32(scale)
    o_ref[...] = vals.astype(o_ref.dtype)


# ----------------------------------------------------------------------------
# Wrapper (forward pass of TokenEmbedding)
# ----------------------------------------------------------------------------
def token_embedding(tokens: jax.Array,
                    emb_table: jax.Array,
                    *,
                    tok_tile: int = TOK_TILE) -> jax.Array:
    """tokens: int array of any shape; emb_table: (vocab_size, emb_size).

    Returns embedding(tokens) * sqrt(emb_size) with shape tokens.shape + (E,).
    """
    V, E = emb_table.shape
    scale = math.sqrt(E)
    out_dtype = emb_table.dtype
    itemsize = jnp.dtype(out_dtype).itemsize

    # Lane-dense layout: pad the embedding dim to a multiple of 128.
    # TODO(synk): ideally the table is stored pre-padded (and optionally
    # pre-scaled by sqrt(E)) at parameter-init time instead of per call.
    E_pad = pl.cdiv(E, 128) * 128
    table = emb_table if E_pad == E else jnp.pad(emb_table, ((0, 0), (0, E_pad - E)))

    ids = tokens.reshape(-1).astype(jnp.int32)          # tokens.long(); assumes V < 2**31
    n = ids.shape[0]

    # Tile sizing: big enough to amortize the ~0.35 us per-grid-step overhead,
    # clamped by (a) a VMEM byte budget (gather scratch + double-buffered
    # output tile — conservative for v7x's 64 MiB VMEM) and (b) the token
    # count, so tiny inputs don't gather lots of padded rows.
    max_tile_bytes = 8 << 20
    tok_tile = min(tok_tile, max(8, (max_tile_bytes // (E_pad * itemsize)) // 8 * 8))
    tok_tile = max(8, min(tok_tile, pl.cdiv(n, 8) * 8))

    n_pad = pl.cdiv(n, tok_tile) * tok_tile
    if n_pad != n:
        ids = jnp.pad(ids, (0, n_pad - n))              # padded tail gathers row 0 (sliced off)

    grid = (n_pad // tok_tile,)
    tile_bytes = tok_tile * E_pad * itemsize
    vmem_limit = int(min(128 << 20, max(32 << 20, 6 * tile_bytes)))

    out = pl.pallas_call(
        partial(_token_embedding_kernel, tok_tile=tok_tile, scale=scale),
        out_shape=jax.ShapeDtypeStruct((n_pad, E_pad), out_dtype),
        grid_spec=pltpu.PrefetchScalarGridSpec(
            num_scalar_prefetch=1,
            grid=grid,
            in_specs=[pl.BlockSpec(memory_space=pl.ANY)],        # table stays in HBM
            out_specs=pl.BlockSpec((tok_tile, E_pad), lambda i, ids_ref: (i, 0)),
            scratch_shapes=[
                pltpu.VMEM((tok_tile, E_pad), out_dtype),        # gather buffer
                pltpu.SemaphoreType.DMA((1,)),                   # shared by all row DMAs
            ],
        ),
        compiler_params=pltpu.CompilerParams(
            dimension_semantics=("parallel",),   # v7x: shard token tiles over 2 TCs
            vmem_limit_bytes=vmem_limit,
        ),
        cost_estimate=pl.CostEstimate(
            flops=n_pad * E_pad,
            transcendentals=0,
            bytes_accessed=2 * n_pad * E_pad * itemsize,
        ),
    )(ids, table)

    return out[:n, :E].reshape(*tokens.shape, E)


# ----------------------------------------------------------------------------
# Demo / correctness check
# ----------------------------------------------------------------------------
if __name__ == "__main__":
    key = jax.random.PRNGKey(0)
    k_tok, k_emb = jax.random.split(key)

    VOCAB = 1000
    EMB = 128        # lane-dense embedding size (multiple of 128)
    S, B = 8, 2      # small seq-first token batch, as used with nn.Transformer

    tokens = jax.random.randint(k_tok, (S, B), 0, VOCAB, dtype=jnp.int32)
    # nn.Embedding weight init (N(0,1)) done as plain-JAX parameter setup.
    emb_table = jax.random.normal(k_emb, (VOCAB, EMB), dtype=jnp.float32)

    out = token_embedding(tokens, emb_table)
    out = jax.block_until_ready(out)

    # Pure-JAX reference: embedding(tokens.long()) * sqrt(emb_size)
    ref = emb_table[tokens] * math.sqrt(EMB)
    assert out.shape == (S, B, EMB)
    assert jnp.allclose(out, ref, atol=1e-5), "mismatch vs reference"

    print("KERNEL_OK")
</pallas_src>

<mosaic_0001>
module attributes {stable_mosaic.version = 11 : i64} {
  func.func @_token_embedding_kernel(%arg0: i32, %arg1: memref<16xi32, #tpu.memory_space<smem>>, %arg2: memref<1000x128xf32, #tpu.memory_space<any>>, %arg3: memref<16x128xf32, #tpu.memory_space<vmem>>, %arg4: memref<16x128xf32, #tpu.memory_space<vmem>>, %arg5: memref<1x!tpu.dma_semaphore, #tpu.memory_space<semaphore_mem>>) attributes {dimension_semantics = [#tpu.dimension_semantics<parallel>], iteration_bounds = array<i64: 1>, scalar_prefetch = 1 : i64, scratch_operands = 2 : i64, tpu.core_type = #tpu.core_type<tc>, window_params = [{}, {transform_indices = @transform_1, window_bounds = array<i64: 16, 128>}]} {
    %c16_i32 = arith.constant 16 : i32
    %0 = arith.muli %arg0, %c16_i32 : i32
    %c0_i32 = arith.constant 0 : i32
    %c16_i32_0 = arith.constant 16 : i32
    %1 = arith.addi %c0_i32, %c16_i32_0 : i32
    %c1_i32 = arith.constant 1 : i32
    scf.for %arg6 = %c0_i32 to %1 step %c1_i32  : i32 {
      %c1_i32_9 = arith.constant 1 : i32
      %7 = arith.muli %arg6, %c1_i32_9 : i32
      %c0_i32_10 = arith.constant 0 : i32
      %8 = arith.addi %c0_i32_10, %7 : i32
      %9 = arith.addi %0, %8 : i32
      %10 = arith.index_cast %9 : i32 to index
      %11 = memref.load %arg1[%10] : memref<16xi32, #tpu.memory_space<smem>>
      %c0_i32_11 = arith.constant 0 : i32
      %c0_i32_12 = arith.constant 0 : i32
      %12 = tpu.memref_slice %arg2[%11, %c0_i32_12] : memref<1000x128xf32, #tpu.memory_space<any>> -> memref<1x128xf32, #tpu.memory_space<any>>
      %c0_i32_13 = arith.constant 0 : i32
      %13 = tpu.memref_slice %arg4[%8, %c0_i32_13] : memref<16x128xf32, #tpu.memory_space<vmem>> -> memref<1x128xf32, #tpu.memory_space<vmem>>
      %14 = tpu.memref_slice %arg5[%c0_i32_11] : memref<1x!tpu.dma_semaphore, #tpu.memory_space<semaphore_mem>> -> memref<1x!tpu.dma_semaphore, #tpu.memory_space<semaphore_mem>>
      %15 = tpu.memref_squeeze %14 : memref<1x!tpu.dma_semaphore, #tpu.memory_space<semaphore_mem>> -> memref<!tpu.dma_semaphore, #tpu.memory_space<semaphore_mem>>
      tpu.enqueue_dma source(%12 : memref<1x128xf32, #tpu.memory_space<any>>) target(%13 : memref<1x128xf32, #tpu.memory_space<vmem>>) target_semaphore(%15 : memref<!tpu.dma_semaphore, #tpu.memory_space<semaphore_mem>>)
    }
    %c16_i32_1 = arith.constant 16 : i32
    %c0_i32_2 = arith.constant 0 : i32
    %c16_i32_3 = arith.constant 16 : i32
    %2 = arith.addi %c0_i32_2, %c16_i32_3 : i32
    %c1_i32_4 = arith.constant 1 : i32
    scf.for %arg6 = %c0_i32_2 to %2 step %c1_i32_4  : i32 {
      %c1_i32_9 = arith.constant 1 : i32
      %7 = arith.muli %arg6, %c1_i32_9 : i32
      %c0_i32_10 = arith.constant 0 : i32
      %8 = arith.addi %c0_i32_10, %7 : i32
      %c0_i32_11 = arith.constant 0 : i32
      %c0_i32_12 = arith.constant 0 : i32
      %c0_i32_13 = arith.constant 0 : i32
      %9 = tpu.memref_slice %arg2[%c0_i32_12, %c0_i32_13] : memref<1000x128xf32, #tpu.memory_space<any>> -> memref<1x128xf32, #tpu.memory_space<any>>
      %c0_i32_14 = arith.constant 0 : i32
      %10 = tpu.memref_slice %arg4[%8, %c0_i32_14] : memref<16x128xf32, #tpu.memory_space<vmem>> -> memref<1x128xf32, #tpu.memory_space<vmem>>
      %11 = tpu.memref_slice %arg5[%c0_i32_11] : memref<1x!tpu.dma_semaphore, #tpu.memory_space<semaphore_mem>> -> memref<1x!tpu.dma_semaphore, #tpu.memory_space<semaphore_mem>>
      %12 = tpu.memref_squeeze %11 : memref<1x!tpu.dma_semaphore, #tpu.memory_space<semaphore_mem>> -> memref<!tpu.dma_semaphore, #tpu.memory_space<semaphore_mem>>
      tpu.wait_dma2 semaphore(%12 : memref<!tpu.dma_semaphore, #tpu.memory_space<semaphore_mem>>) src(%9 : memref<1x128xf32, #tpu.memory_space<any>>) dst(%10 : memref<1x128xf32, #tpu.memory_space<vmem>>)
    }
    %c16_i32_5 = arith.constant 16 : i32
    %c0 = arith.constant 0 : index
    %c0_6 = arith.constant 0 : index
    %3 = vector.load %arg4[%c0, %c0_6] : memref<16x128xf32, #tpu.memory_space<vmem>>, vector<16x128xf32>
    %cst = arith.constant 11.3137083 : f32
    %4 = vector.broadcast %cst : f32 to vector<16x128xf32>
    %5 = arith.mulf %3, %4 : vector<16x128xf32>
    %c0_7 = arith.constant 0 : index
    %c0_8 = arith.constant 0 : index
    %6 = vector.load %arg3[%c0_7, %c0_8] : memref<16x128xf32, #tpu.memory_space<vmem>>, vector<16x128xf32>
    tpu.vector_store %arg3[%c0_7, %c0_8], %5 {strides = array<i32>} : memref<16x128xf32, #tpu.memory_space<vmem>>, vector<16x128xf32>,
    return
  }
  func.func @transform_1(%arg0: i32, %arg1: memref<16xi32, #tpu.memory_space<smem>>) -> (i32, i32) {
    %c0_i32 = arith.constant 0 : i32
    %c0_i32_0 = arith.constant 0 : i32
    return %arg0, %c0_i32 : i32, i32
  }
}

</mosaic_0001>

<llo_original>
// kernel: tpu_custom_call.1
$region0: #{tpu_custom_call.1}
  #allocation0 [shape = 'u32[]', space=smem, size = 0x4, offset = 0x4, fixed_abs, tag = 'smem constant byte address 0x4 - core index']
  #allocation1 [shape = 'u32[144,128]{1,0:T(1,128)}', space=vmem, size = 0x12000, scoped, tag = 'internal scratch']
  #allocation2 [shape = 'f32[16,128]{1,0:T(8,128)}', space=vmem, size = 0x2000, scoped, tag = 'scratch operand']
  #allocation3 [shape = 's32[1]{0}', space=sflag, size = 0x4, scoped, tag = 'scratch operand']
  #allocation4 [shape = 's32[1]{0}', space=sflag, size = 0x4, scoped, tag = 'scoped memory for tpu_custom_call.1']
  #allocation5 [shape = 'u8[512]{0}', space=smem, size = 0x200, scoped, tag = 'prefetched SMEM operand 0']
  #allocation8 [shape = 's32[]', space=sflag, size = 0x4, offset = 0, fixed_abs, tag = 'sflag constant byte address 0x0 - dummy sync flag']
  #allocation9 [shape = 's32[]', space=sflag, size = 0x4, offset = 0, fixed_abs, tag = 'sflag constant byte address 0x0 - dummy sync flag']
  #allocation10 [shape = 'u32[]', space=smem, size = 0x4, offset = 0x44, fixed_abs, tag = 'smem constant byte address 0x44 - assertion arg 0']
  #allocation11 [shape = 'u32[]', space=smem, size = 0x4, offset = 0x48, fixed_abs, tag = 'smem constant byte address 0x48 - assertion arg 1']
  %s0 = inlined_call_operand.hbm [shape: s32[16], index: 0, kind: input, shape index: {}]
  %s1 = inlined_call_operand.hbm [shape: f32[1000,128], index: 1, kind: input, shape index: {}]
  %s2 = inlined_call_operand.hbm [shape: f32[16,128], index: 2, kind: output, shape index: {}]
  %s3 = sld [smem:[#allocation0]]
  $region28: #{tpu_custom_call.1} parent=0
    _
  %s5 = ssub.s32 1, %s3
  %s6 = scalar_select 0, %s5, %s3
  %8 = dma.hbm_to_smem %s0, 16, [#allocation5], [#allocation4]
  %9 = dma.done [#allocation4], 16
  %10 = sfence
  $region1: #{tpu_custom_call.1} parent=0
    #allocation6 [shape = 'u8[8192]{0}', space=vmem, size = 0x2000, scoped, tag = 'output window, operand 0, single buffered']
    #allocation7 [shape = 's32[1]{0}', space=sflag, size = 0x4, scoped, tag = 'scoped memory for tpu_custom_call.1']
    %11 = vsyncpa [#allocation7], 0
    %s12 = smul.u32 0, 16
    loop: start=0, step=1, limit=16
    $region2: #{tpu_custom_call.1} parent=1 // loop_pre_header
      _
    $region3: #{tpu_custom_call.1} parent=1 // loop_header
      %s14 = sphi 0, %s18
      %p15 = scmp.ge.s32.totalorder %s14, 16
    $region4: #{tpu_custom_call.1} parent=1 // loop_header_branch
      %17 = sbr.rel (%p15) target = $region8
    $region5: #{tpu_custom_call.1} parent=1 // loop_body
      %s19 = sadd.s32 %s12, %s14
      %s20 = sld [smem:[#allocation5 + %s19]]
      %s21 = smul.addr %s20, 16
      %s22 = scalar_lea.hbm %s1, %s21
      %s23 = scalar_lea.vmem [#allocation2], %s14
      // Predicated region
      $region9: #{tpu_custom_call.1} parent=5 // pred_check
        _
      $region10: #{tpu_custom_call.1} parent=5 // pred_check_branch
        %25 = sbr.rel target = $region12
      $region11: #{tpu_custom_call.1} parent=5 // pred_region
        %26 = sst [smem:[#allocation10]] [#allocation9]
        %27 = sst [smem:[#allocation11]] [#allocation8]
      $region12: #{tpu_custom_call.1} parent=5 // pred_fallthru
        _
      %29 = shalt.err (0)
      %s31 = sshll.u32 %s23, 4
      %s32 = int_to_ptr.vmem [resolvable:$true] %s31
      %34 = dma.hbm_to_vmem [thread:$0]  %s22, 16, %s32, [#allocation3]
    $region6: #{tpu_custom_call.1} parent=1 // loop_footer
      %s18 = sadd.s32 1, %s14
    $region7: #{tpu_custom_call.1} parent=1 // loop_footer_branch
      %13 = sbr.rel target = $region3
    $region8: #{tpu_custom_call.1} parent=1 // loop_exit
      _
    loop: start=0, step=1, limit=16
    $region13: #{tpu_custom_call.1} parent=1 // loop_pre_header
      _
    $region14: #{tpu_custom_call.1} parent=1 // loop_header
      %s36 = sphi 0, %s40
      %p37 = scmp.ge.s32.totalorder %s36, 16
    $region15: #{tpu_custom_call.1} parent=1 // loop_header_branch
      %39 = sbr.rel (%p37) target = $region19
    $region16: #{tpu_custom_call.1} parent=1 // loop_body
      %s41 = smul.u32 1, 1
      %s42 = sshll.u32 %s41, 4
      %43 = dma.done [#allocation3], %s42
    $region17: #{tpu_custom_call.1} parent=1 // loop_footer
      %s40 = sadd.s32 1, %s36
    $region18: #{tpu_custom_call.1} parent=1 // loop_footer_branch
      %35 = sbr.rel target = $region14
    $region19: #{tpu_custom_call.1} parent=1 // loop_exit
      _
    %v44 = vld [vmem:[#allocation2] sm:$0xff]
    %v45 = vld [vmem:[#allocation2 + $0x8] sm:$0xff]
    %v46 = vmul.f32 %v44, 11.313708
    %v47 = vmul.f32 %v45, 11.313708
    %48 = vst [vmem:[#allocation6] sm:$0xff] %v46
    %49 = vst [vmem:[#allocation6 + $0x8] sm:$0xff] %v47
    // Predicated region
    $region20: #{tpu_custom_call.1} parent=1 // pred_check
      _
    $region21: #{tpu_custom_call.1} parent=1 // pred_check_branch
      %51 = sbr.rel (0) target = $region23
    $region22: #{tpu_custom_call.1} parent=1 // pred_region
      %s53 = ssub.s32 256, 256
      %54 = vsyncadd [#allocation7], %s53
      %s55 = sshll.u32 [#allocation6], 4
      %s56 = int_to_ptr.vmem [resolvable:$true] %s55
      %61 = dma.vmem_to_hbm [thread:$0]  %s56, 256, %s2, [#allocation7], 128, 128, 8
    $region23: #{tpu_custom_call.1} parent=1 // pred_fallthru
      _
    // Predicated region
    $region24: #{tpu_custom_call.1} parent=1 // pred_check
      _
    $region25: #{tpu_custom_call.1} parent=1 // pred_check_branch
      %63 = sbr.rel (0) target = $region27
    $region26: #{tpu_custom_call.1} parent=1 // pred_region
      %64 = dma.done [#allocation7], 256
    $region27: #{tpu_custom_call.1} parent=1 // pred_fallthru
      _
    %65 = vsyncpa [#allocation7], 1
  %66 = vsyncmov [#allocation3]
  %s67 = vpop.sfrf %66
  %p68 = scmp.eq.s32.totalorder %s67, 0
  %p69 = pneg %p68
  %71 = shalt.err (%p69)

</llo_original>
